<compile_context>
chip_gen: v6e
topology: v6e:2x2x1
jax: 0.10.0
libtpu: 0.0.40
codegen_flags: <defaults>
</compile_context>

<pallas_src>
import math

import jax
import jax.numpy as jnp
from jax import lax
from jax.experimental import pallas as pl
from jax.experimental.pallas import tpu as pltpu

_BN_EPS = 1e-5
_LN_EPS = 1e-5
_INV_SQRT2 = 1.0 / math.sqrt(2.0)
_TANH_C = math.sqrt(2.0 / math.pi)


def _cdiv(a, b):
    return -(-a // b)


def _round_up(a, m):
    return _cdiv(a, m) * m


def _gelu(t, approximate):
    if approximate:
        # PyTorch nn.GELU(approximate='tanh'): tanh lowers to the EUP slot (idle otherwise).
        return 0.5 * t * (1.0 + jnp.tanh(_TANH_C * (t + 0.044715 * t * t * t)))
    # PyTorch nn.GELU() default = exact (erf) GELU.
    return 0.5 * t * (1.0 + lax.erf(t * _INV_SQRT2))


def _layernorm(t, dim, eps):
    # Single-pass mean / E[t^2]: two independent cross-lane reductions (no reduce->reduce chain).
    inv_d = 1.0 / float(dim)
    mean = jnp.sum(t, axis=-1, keepdims=True) * inv_d
    msq = jnp.sum(t * t, axis=-1, keepdims=True) * inv_d
    var = jnp.maximum(msq - mean * mean, 0.0)
    return (t - mean) * lax.rsqrt(var + eps)


def _make_embed_kernel(din, hidden, ln_eps, approx_gelu, mxu_dtype, precision):
    def kernel(x_ref, scale_ref, shift_ref, w1_ref, b1_ref, w2_ref, b2_ref, o_ref):
        x = x_ref[...].astype(jnp.float32)                       # (T, Din)
        # BatchNorm (global stats + affine pre-folded in the wrapper) -> single FMA.
        x = x * scale_ref[...] + shift_ref[...]

        # embed1: LayerNorm(no affine) -> Linear(Din -> H) -> GELU
        xn = _layernorm(x, din, ln_eps).astype(mxu_dtype)
        h = jnp.dot(xn, w1_ref[...], preferred_element_type=jnp.float32,
                    precision=precision)
        h = _gelu(h + b1_ref[...], approx_gelu)

        # embed2: LayerNorm(no affine) -> Linear(H -> E) -> GELU
        hn = _layernorm(h, hidden, ln_eps).astype(mxu_dtype)
        e = jnp.dot(hn, w2_ref[...], preferred_element_type=jnp.float32,
                    precision=precision)
        o_ref[...] = _gelu(e + b2_ref[...], approx_gelu).astype(o_ref.dtype)

    return kernel


def _vmem_limit_bytes():
    """~75% of the chip's physical VMEM (48 MiB on v7x's 64 MiB, 96 MiB on v5e/v6e)."""
    try:
        cap = int(pltpu.get_tpu_info().vmem_capacity_bytes)
    except Exception:
        cap = 64 * 1024 * 1024  # conservative fallback (v7x per-TensorCore)
    return int(min(100 * 1024 * 1024, 0.75 * cap))


def _choose_rows_tile(rows, max_rows, *, min_steps=1, cap=1024):
    """Row-tile size: multiple of 8 (or == rows), within the VMEM-derived row budget,
    >= min_steps grid steps when rows permits, preferring an exact divisor of rows so the
    last tile isn't a masked partial tile."""
    if rows <= 8:
        return rows
    t = max(8, min(max_rows, rows, cap))
    if min_steps > 1 and rows > 8:
        t = min(t, max(8, _round_up(_cdiv(rows, min_steps), 8)))
    t = max(8, (t // 8) * 8)
    # Prefer an exact divisor, but never shrink the tile by more than 2x for it.
    d = t
    while d >= max(8, t // 2):
        if rows % d == 0:
            return d
        d -= 8
    return t


def embed_forward(x, bn_weight, bn_bias, w1, b1, w2, b2, *,
                  out_dtype=None, mxu_dtype=None, approx_gelu=False, precision=None,
                  bn_eps=_BN_EPS, ln_eps=_LN_EPS, force_path=None):
    """x: (B, S, Din) -> (S, B, E), matching PyTorch Embed.forward.

    bn_weight / bn_bias: (Din,) BatchNorm1d affine.
    w1: (Din, H), b1: (H,), w2: (H, E), b2: (E,)   (Linear weights pre-transposed).
    mxu_dtype=jnp.bfloat16 enables the bf16 MXU fast path; approx_gelu=True uses tanh GELU.
    """
    B, S, Din = x.shape
    H = w1.shape[1]
    E = w2.shape[1]
    out_dtype = x.dtype if out_dtype is None else jnp.dtype(out_dtype)
    mxu_dtype = jnp.dtype(jnp.float32) if mxu_dtype is None else jnp.dtype(mxu_dtype)

    # --- BatchNorm1d(track_running_stats=False): per-feature stats over ALL B*S rows.
    # Single fused streaming pass (sum + sumsq); folded with the affine into scale/shift.
    xf = x.astype(jnp.float32)
    n = float(B * S)
    s1 = jnp.sum(xf, axis=(0, 1))                         # (Din,)
    s2 = jnp.sum(xf * xf, axis=(0, 1))                    # (Din,) fuses with s1 (one pass)
    mu = s1 / n
    var = jnp.maximum(s2 / n - mu * mu, 0.0)              # biased variance, single pass
    g = bn_weight.reshape(-1).astype(jnp.float32)
    scale_v = g * lax.rsqrt(var + bn_eps)
    shift_v = bn_bias.reshape(-1).astype(jnp.float32) - mu * scale_v
    scale = scale_v.reshape(1, Din)
    shift = shift_v.reshape(1, Din)

    w1c = w1.astype(mxu_dtype)
    w2c = w2.astype(mxu_dtype)
    b1_2d = b1.reshape(1, H).astype(jnp.float32)
    b2_2d = b2.reshape(1, E).astype(jnp.float32)

    # --- VMEM-budget-driven tiling (fits v7x's 64 MiB; large tiles on v5e/v6e's 128 MiB).
    vmem_limit = _vmem_limit_bytes()
    budget = int(vmem_limit * 0.8)                        # headroom for compiler scratch
    w_bytes = mxu_dtype.itemsize
    in_bytes = x.dtype.itemsize
    out_bytes = out_dtype.itemsize
    # Resident operands (constant index_map): pipelined with 2 buffers each, never re-DMA'd.
    weight_bytes = 2 * ((Din * H + H * E) * w_bytes + 4 * (2 * Din + H + E))
    # Per-row: double-buffered in/out blocks + f32 working set (x, h, e and normalized copies).
    per_row = 2 * Din * in_bytes + 2 * E * out_bytes + 4 * (2 * Din + 2 * H + 2 * E)
    max_rows = max(8, (budget - weight_bytes) // per_row)

    kernel = _make_embed_kernel(Din, H, ln_eps, approx_gelu, mxu_dtype, precision)

    packed_ok = (E % 128 == 0) or (B == 1)
    if force_path is None:
        # Packed path avoids any x transpose but only feeds ts<=S rows per step to the MXU;
        # with small S, flatten to (S*B, Din) so every step gets a full-height M tile.
        use_packed = packed_ok and S >= 256
    else:
        use_packed = (force_path == "packed") and packed_ok

    if use_packed:
        # Grid over (batch, seq-tiles); output packed lane-dense as (S, B*E) so the final
        # reshape to (S, B, E) is free (no extra HBM transpose pass).
        ts = _choose_rows_tile(S, max_rows, min_steps=(2 if B == 1 else 1))
        n_s = _cdiv(S, ts)
        out_flat = pl.pallas_call(
            kernel,
            out_shape=jax.ShapeDtypeStruct((S, B * E), out_dtype),
            grid=(B, n_s),
            in_specs=[
                pl.BlockSpec((None, ts, Din), lambda b, si: (b, si, 0)),  # x rows
                pl.BlockSpec((1, Din), lambda b, si: (0, 0)),             # BN scale (resident)
                pl.BlockSpec((1, Din), lambda b, si: (0, 0)),             # BN shift (resident)
                pl.BlockSpec((Din, H), lambda b, si: (0, 0)),             # w1 (resident)
                pl.BlockSpec((1, H), lambda b, si: (0, 0)),               # b1
                pl.BlockSpec((H, E), lambda b, si: (0, 0)),               # w2 (resident)
                pl.BlockSpec((1, E), lambda b, si: (0, 0)),               # b2
            ],
            out_specs=pl.BlockSpec((ts, E), lambda b, si: (si, b)),
            compiler_params=pltpu.CompilerParams(
                dimension_semantics=("parallel", "parallel"),
                vmem_limit_bytes=vmem_limit,
            ),
        )(x, scale, shift, w1c, b1_2d, w2c, b2_2d)
        return out_flat.reshape(S, B, E)

    # Flattened path: rows in (s, b) order via one cheap Din-wide transpose of x; the output
    # reshape to (S, B, E) is free and the MXU M dimension per step is tm rows.
    if B == 1:
        xt = x.reshape(S, Din)
    else:
        xt = jnp.transpose(x, (1, 0, 2)).reshape(S * B, Din)
    N = S * B
    tm = _choose_rows_tile(N, max_rows, min_steps=2)       # >=2 steps -> both v7x TCs busy
    out2d = pl.pallas_call(
        kernel,
        out_shape=jax.ShapeDtypeStruct((N, E), out_dtype),
        grid=(_cdiv(N, tm),),
        in_specs=[
            pl.BlockSpec((tm, Din), lambda i: (i, 0)),
            pl.BlockSpec((1, Din), lambda i: (0, 0)),
            pl.BlockSpec((1, Din), lambda i: (0, 0)),
            pl.BlockSpec((Din, H), lambda i: (0, 0)),
            pl.BlockSpec((1, H), lambda i: (0, 0)),
            pl.BlockSpec((H, E), lambda i: (0, 0)),
            pl.BlockSpec((1, E), lambda i: (0, 0)),
        ],
        out_specs=pl.BlockSpec((tm, E), lambda i: (i, 0)),
        compiler_params=pltpu.CompilerParams(
            dimension_semantics=("parallel",),
            vmem_limit_bytes=vmem_limit,
        ),
    )(xt, scale, shift, w1c, b1_2d, w2c, b2_2d)
    return out2d.reshape(S, B, E)


def _reference(x, bn_weight, bn_bias, w1, b1, w2, b2):
    """Pure-JAX f32 reference matching the PyTorch module (exact GELU, two-pass norms)."""
    B, S, Din = x.shape
    x2d = x.reshape(B * S, Din).astype(jnp.float32)
    mu = jnp.mean(x2d, axis=0, keepdims=True)
    var = jnp.mean((x2d - mu) ** 2, axis=0, keepdims=True)
    z = (x2d - mu) / jnp.sqrt(var + _BN_EPS) * bn_weight + bn_bias

    def ln(t):
        m = jnp.mean(t, axis=-1, keepdims=True)
        v = jnp.mean((t - m) ** 2, axis=-1, keepdims=True)
        return (t - m) / jnp.sqrt(v + _LN_EPS)

    h = jax.nn.gelu(ln(z) @ w1 + b1, approximate=False)
    e = jax.nn.gelu(ln(h) @ w2 + b2, approximate=False)
    return e.reshape(B, S, -1).transpose(1, 0, 2)


if __name__ == "__main__":
    B, S = 2, 32
    input_dim, hidden_dim, embed_dim = 32, 64, 128

    key = jax.random.PRNGKey(0)
    kx, kg, kb, kw1, kb1, kw2, kb2 = jax.random.split(key, 7)

    x = jax.random.normal(kx, (B, S, input_dim), dtype=jnp.float32)

    # Deterministic synthetic parameters (shapes match the PyTorch module;
    # Linear weights are pre-transposed to (in, out)).
    bn_w = 1.0 + 0.1 * jax.random.normal(kg, (input_dim,), jnp.float32)
    bn_b = 0.1 * jax.random.normal(kb, (input_dim,), jnp.float32)
    w1 = jax.random.normal(kw1, (input_dim, hidden_dim), jnp.float32) / math.sqrt(input_dim)
    b1 = 0.1 * jax.random.normal(kb1, (hidden_dim,), jnp.float32)
    w2 = jax.random.normal(kw2, (hidden_dim, embed_dim), jnp.float32) / math.sqrt(hidden_dim)
    b2 = 0.1 * jax.random.normal(kb2, (embed_dim,), jnp.float32)

    ref = _reference(x, bn_w, bn_b, w1, b1, w2, b2)

    # 1) Parity path (default): f32 MXU, exact erf GELU; small S routes to the flattened
    #    (S*B, Din) row tiling with >=2 grid steps.
    out = embed_forward(x, bn_w, bn_b, w1, b1, w2, b2)
    jax.block_until_ready(out)
    assert out.shape == (S, B, embed_dim), out.shape
    err = float(jnp.max(jnp.abs(out - ref)))
    assert jnp.allclose(out, ref, rtol=1e-4, atol=1e-4), err

    # 2) Throughput path: packed (S, B*E) output layout, bf16 MXU operands (f32 accumulate),
    #    tanh GELU (EUP), bf16 output store.  Loose tolerance (deliberate low-precision path).
    out_fast = embed_forward(x, bn_w, bn_b, w1, b1, w2, b2,
                             mxu_dtype=jnp.bfloat16, approx_gelu=True,
                             out_dtype=jnp.bfloat16, force_path="packed")
    jax.block_until_ready(out_fast)
    assert out_fast.shape == (S, B, embed_dim), out_fast.shape
    assert out_fast.dtype == jnp.bfloat16
    err_fast = float(jnp.max(jnp.abs(out_fast.astype(jnp.float32) - ref)))
    assert err_fast < 0.25, err_fast

    print("KERNEL_OK")
</pallas_src>

<mosaic_0001>
module attributes {stable_mosaic.version = 11 : i64} {
  func.func @kernel(%arg0: i32, %arg1: memref<32x32xf32, #tpu.memory_space<vmem>>, %arg2: memref<1x32xf32, #tpu.memory_space<vmem>>, %arg3: memref<1x32xf32, #tpu.memory_space<vmem>>, %arg4: memref<32x64xf32, #tpu.memory_space<vmem>>, %arg5: memref<1x64xf32, #tpu.memory_space<vmem>>, %arg6: memref<64x128xf32, #tpu.memory_space<vmem>>, %arg7: memref<1x128xf32, #tpu.memory_space<vmem>>, %arg8: memref<32x128xf32, #tpu.memory_space<vmem>>) attributes {dimension_semantics = [#tpu.dimension_semantics<parallel>], iteration_bounds = array<i64: 2>, scalar_prefetch = 0 : i64, scratch_operands = 0 : i64, tpu.core_type = #tpu.core_type<tc>, window_params = [{transform_indices = @transform_0, window_bounds = array<i64: 32, 32>}, {pipeline_mode = #tpu.pipeline_mode<synchronous>, transform_indices = @transform_1, window_bounds = array<i64: 1, 32>}, {pipeline_mode = #tpu.pipeline_mode<synchronous>, transform_indices = @transform_2, window_bounds = array<i64: 1, 32>}, {pipeline_mode = #tpu.pipeline_mode<synchronous>, transform_indices = @transform_3, window_bounds = array<i64: 32, 64>}, {pipeline_mode = #tpu.pipeline_mode<synchronous>, transform_indices = @transform_4, window_bounds = array<i64: 1, 64>}, {pipeline_mode = #tpu.pipeline_mode<synchronous>, transform_indices = @transform_5, window_bounds = array<i64: 64, 128>}, {pipeline_mode = #tpu.pipeline_mode<synchronous>, transform_indices = @transform_6, window_bounds = array<i64: 1, 128>}, {transform_indices = @transform_7, window_bounds = array<i64: 32, 128>}]} {
    %c0 = arith.constant 0 : index
    %c0_0 = arith.constant 0 : index
    %0 = vector.load %arg1[%c0, %c0_0] : memref<32x32xf32, #tpu.memory_space<vmem>>, vector<32x32xf32>
    %c0_1 = arith.constant 0 : index
    %c0_2 = arith.constant 0 : index
    %1 = vector.load %arg2[%c0_1, %c0_2] : memref<1x32xf32, #tpu.memory_space<vmem>>, vector<1x32xf32>
    %2 = vector.broadcast %1 : vector<1x32xf32> to vector<32x32xf32>
    %3 = arith.mulf %0, %2 : vector<32x32xf32>
    %c0_3 = arith.constant 0 : index
    %c0_4 = arith.constant 0 : index
    %4 = vector.load %arg3[%c0_3, %c0_4] : memref<1x32xf32, #tpu.memory_space<vmem>>, vector<1x32xf32>
    %5 = vector.broadcast %4 : vector<1x32xf32> to vector<32x32xf32>
    %6 = arith.addf %3, %5 : vector<32x32xf32>
    %cst = arith.constant dense<0.000000e+00> : vector<32xf32>
    %7 = vector.multi_reduction <add>, %6, %cst [1] : vector<32x32xf32> to vector<32xf32>
    %8 = vector.shape_cast %7 : vector<32xf32> to vector<32x1xf32>
    %cst_5 = arith.constant 3.125000e-02 : f32
    %9 = vector.broadcast %cst_5 : f32 to vector<32x1xf32>
    %10 = arith.mulf %8, %9 : vector<32x1xf32>
    %11 = arith.mulf %6, %6 : vector<32x32xf32>
    %cst_6 = arith.constant dense<0.000000e+00> : vector<32xf32>
    %12 = vector.multi_reduction <add>, %11, %cst_6 [1] : vector<32x32xf32> to vector<32xf32>
    %13 = vector.shape_cast %12 : vector<32xf32> to vector<32x1xf32>
    %cst_7 = arith.constant 3.125000e-02 : f32
    %14 = vector.broadcast %cst_7 : f32 to vector<32x1xf32>
    %15 = arith.mulf %13, %14 : vector<32x1xf32>
    %16 = arith.mulf %10, %10 : vector<32x1xf32>
    %17 = arith.subf %15, %16 : vector<32x1xf32>
    %cst_8 = arith.constant 0.000000e+00 : f32
    %18 = vector.broadcast %cst_8 : f32 to vector<32x1xf32>
    %19 = arith.maximumf %17, %18 : vector<32x1xf32>
    %20 = vector.broadcast %10 : vector<32x1xf32> to vector<32x32xf32>
    %21 = arith.subf %6, %20 : vector<32x32xf32>
    %cst_9 = arith.constant 9.99999974E-6 : f32
    %22 = vector.broadcast %cst_9 : f32 to vector<32x1xf32>
    %23 = arith.addf %19, %22 : vector<32x1xf32>
    %24 = math.rsqrt %23 : vector<32x1xf32>
    %25 = vector.broadcast %24 : vector<32x1xf32> to vector<32x32xf32>
    %26 = arith.mulf %21, %25 : vector<32x32xf32>
    %c0_10 = arith.constant 0 : index
    %c0_11 = arith.constant 0 : index
    %27 = vector.load %arg4[%c0_10, %c0_11] : memref<32x64xf32, #tpu.memory_space<vmem>>, vector<32x64xf32>
    %cst_12 = arith.constant dense<0.000000e+00> : vector<32x64xf32>
    %28 = tpu.matmul %26, %27, %cst_12 {dimension_numbers = #tpu.dot_dimension_numbers<[1], [0], [0], [1], [0, 0, 1, 1], [], []>} : vector<32x32xf32>, vector<32x64xf32>, vector<32x64xf32> -> vector<32x64xf32>
    %c0_13 = arith.constant 0 : index
    %c0_14 = arith.constant 0 : index
    %29 = vector.load %arg5[%c0_13, %c0_14] : memref<1x64xf32, #tpu.memory_space<vmem>>, vector<1x64xf32>
    %30 = vector.broadcast %29 : vector<1x64xf32> to vector<32x64xf32>
    %31 = arith.addf %28, %30 : vector<32x64xf32>
    %cst_15 = arith.constant 5.000000e-01 : f32
    %32 = vector.broadcast %cst_15 : f32 to vector<32x64xf32>
    %33 = arith.mulf %32, %31 : vector<32x64xf32>
    %cst_16 = arith.constant 0.707106769 : f32
    %34 = vector.broadcast %cst_16 : f32 to vector<32x64xf32>
    %35 = arith.mulf %31, %34 : vector<32x64xf32>
    %36 = math.erf %35 : vector<32x64xf32>
    %cst_17 = arith.constant 1.000000e+00 : f32
    %37 = vector.broadcast %cst_17 : f32 to vector<32x64xf32>
    %38 = arith.addf %37, %36 : vector<32x64xf32>
    %39 = arith.mulf %33, %38 : vector<32x64xf32>
    %cst_18 = arith.constant dense<0.000000e+00> : vector<32xf32>
    %40 = vector.multi_reduction <add>, %39, %cst_18 [1] : vector<32x64xf32> to vector<32xf32>
    %41 = vector.shape_cast %40 : vector<32xf32> to vector<32x1xf32>
    %cst_19 = arith.constant 1.562500e-02 : f32
    %42 = vector.broadcast %cst_19 : f32 to vector<32x1xf32>
    %43 = arith.mulf %41, %42 : vector<32x1xf32>
    %44 = arith.mulf %39, %39 : vector<32x64xf32>
    %cst_20 = arith.constant dense<0.000000e+00> : vector<32xf32>
    %45 = vector.multi_reduction <add>, %44, %cst_20 [1] : vector<32x64xf32> to vector<32xf32>
    %46 = vector.shape_cast %45 : vector<32xf32> to vector<32x1xf32>
    %cst_21 = arith.constant 1.562500e-02 : f32
    %47 = vector.broadcast %cst_21 : f32 to vector<32x1xf32>
    %48 = arith.mulf %46, %47 : vector<32x1xf32>
    %49 = arith.mulf %43, %43 : vector<32x1xf32>
    %50 = arith.subf %48, %49 : vector<32x1xf32>
    %cst_22 = arith.constant 0.000000e+00 : f32
    %51 = vector.broadcast %cst_22 : f32 to vector<32x1xf32>
    %52 = arith.maximumf %50, %51 : vector<32x1xf32>
    %53 = vector.broadcast %43 : vector<32x1xf32> to vector<32x64xf32>
    %54 = arith.subf %39, %53 : vector<32x64xf32>
    %cst_23 = arith.constant 9.99999974E-6 : f32
    %55 = vector.broadcast %cst_23 : f32 to vector<32x1xf32>
    %56 = arith.addf %52, %55 : vector<32x1xf32>
    %57 = math.rsqrt %56 : vector<32x1xf32>
    %58 = vector.broadcast %57 : vector<32x1xf32> to vector<32x64xf32>
    %59 = arith.mulf %54, %58 : vector<32x64xf32>
    %c0_24 = arith.constant 0 : index
    %c0_25 = arith.constant 0 : index
    %60 = vector.load %arg6[%c0_24, %c0_25] : memref<64x128xf32, #tpu.memory_space<vmem>>, vector<64x128xf32>
    %cst_26 = arith.constant dense<0.000000e+00> : vector<32x128xf32>
    %61 = tpu.matmul %59, %60, %cst_26 {dimension_numbers = #tpu.dot_dimension_numbers<[1], [0], [0], [1], [0, 0, 1, 1], [], []>} : vector<32x64xf32>, vector<64x128xf32>, vector<32x128xf32> -> vector<32x128xf32>
    %c0_27 = arith.constant 0 : index
    %c0_28 = arith.constant 0 : index
    %62 = vector.load %arg7[%c0_27, %c0_28] : memref<1x128xf32, #tpu.memory_space<vmem>>, vector<1x128xf32>
    %63 = vector.broadcast %62 : vector<1x128xf32> to vector<32x128xf32>
    %64 = arith.addf %61, %63 : vector<32x128xf32>
    %cst_29 = arith.constant 5.000000e-01 : f32
    %65 = vector.broadcast %cst_29 : f32 to vector<32x128xf32>
    %66 = arith.mulf %65, %64 : vector<32x128xf32>
    %cst_30 = arith.constant 0.707106769 : f32
    %67 = vector.broadcast %cst_30 : f32 to vector<32x128xf32>
    %68 = arith.mulf %64, %67 : vector<32x128xf32>
    %69 = math.erf %68 : vector<32x128xf32>
    %cst_31 = arith.constant 1.000000e+00 : f32
    %70 = vector.broadcast %cst_31 : f32 to vector<32x128xf32>
    %71 = arith.addf %70, %69 : vector<32x128xf32>
    %72 = arith.mulf %66, %71 : vector<32x128xf32>
    %c0_32 = arith.constant 0 : index
    %c0_33 = arith.constant 0 : index
    %73 = vector.load %arg8[%c0_32, %c0_33] : memref<32x128xf32, #tpu.memory_space<vmem>>, vector<32x128xf32>
    tpu.vector_store %arg8[%c0_32, %c0_33], %72 {strides = array<i32>} : memref<32x128xf32, #tpu.memory_space<vmem>>, vector<32x128xf32>,
    return
  }
  func.func @transform_0(%arg0: i32) -> (i32, i32) {
    %c0_i32 = arith.constant 0 : i32
    %c0_i32_0 = arith.constant 0 : i32
    return %arg0, %c0_i32 : i32, i32
  }
  func.func @transform_1(%arg0: i32) -> (i32, i32) {
    %c0_i32 = arith.constant 0 : i32
    %c0_i32_0 = arith.constant 0 : i32
    %c0_i32_1 = arith.constant 0 : i32
    return %c0_i32, %c0_i32_0 : i32, i32
  }
  func.func @transform_2(%arg0: i32) -> (i32, i32) {
    %c0_i32 = arith.constant 0 : i32
    %c0_i32_0 = arith.constant 0 : i32
    %c0_i32_1 = arith.constant 0 : i32
    return %c0_i32, %c0_i32_0 : i32, i32
  }
  func.func @transform_3(%arg0: i32) -> (i32, i32) {
    %c0_i32 = arith.constant 0 : i32
    %c0_i32_0 = arith.constant 0 : i32
    %c0_i32_1 = arith.constant 0 : i32
    return %c0_i32, %c0_i32_0 : i32, i32
  }
  func.func @transform_4(%arg0: i32) -> (i32, i32) {
    %c0_i32 = arith.constant 0 : i32
    %c0_i32_0 = arith.constant 0 : i32
    %c0_i32_1 = arith.constant 0 : i32
    return %c0_i32, %c0_i32_0 : i32, i32
  }
  func.func @transform_5(%arg0: i32) -> (i32, i32) {
    %c0_i32 = arith.constant 0 : i32
    %c0_i32_0 = arith.constant 0 : i32
    %c0_i32_1 = arith.constant 0 : i32
    return %c0_i32, %c0_i32_0 : i32, i32
  }
  func.func @transform_6(%arg0: i32) -> (i32, i32) {
    %c0_i32 = arith.constant 0 : i32
    %c0_i32_0 = arith.constant 0 : i32
    %c0_i32_1 = arith.constant 0 : i32
    return %c0_i32, %c0_i32_0 : i32, i32
  }
  func.func @transform_7(%arg0: i32) -> (i32, i32) {
    %c0_i32 = arith.constant 0 : i32
    %c0_i32_0 = arith.constant 0 : i32
    return %arg0, %c0_i32 : i32, i32
  }
}

</mosaic_0001>

<llo_original>
// kernel: tpu_custom_call.1
$region0: #{tpu_custom_call.1}
  #allocation0 [shape = 'u32[]', space=smem, size = 0x4, offset = 0x4, fixed_abs, tag = 'smem constant byte address 0x4 - core index']
  #allocation1 [shape = 'u32[144,128]{1,0:T(1,128)}', space=vmem, size = 0x12000, scoped, tag = 'internal scratch']
  %s0 = inlined_call_operand.vmem [shape: f32[64,32], index: 0, kind: input, shape index: {}]
  %s1 = inlined_call_operand.vmem [shape: f32[1,32], index: 1, kind: input, shape index: {}]
  %s2 = inlined_call_operand.vmem [shape: f32[1,32], index: 2, kind: input, shape index: {}]
  %s3 = inlined_call_operand.vmem [shape: f32[32,64], index: 3, kind: input, shape index: {}]
  %s4 = inlined_call_operand.vmem [shape: f32[1,64], index: 4, kind: input, shape index: {}]
  %s5 = inlined_call_operand.vmem [shape: f32[64,128], index: 5, kind: input, shape index: {}]
  %s6 = inlined_call_operand.vmem [shape: f32[1,128], index: 6, kind: input, shape index: {}]
  %s7 = inlined_call_operand.hbm [shape: f32[64,128], index: 7, kind: output, shape index: {}]
  %s8 = sld [smem:[#allocation0]]
  $region61: #{tpu_custom_call.1} parent=0
    _
  %s10 = ssub.s32 1, %s8
  %s11 = scalar_select 0, %s10, %s8
  $region1: #{tpu_custom_call.1} parent=0
    #allocation2 [shape = 'u8[32768]{0}', space=vmem, size = 0x8000, scoped, tag = 'output window, operand 0']
    #allocation3 [shape = 's32[2]{0}', space=sflag, size = 0x8, scoped, tag = 'scoped memory for tpu_custom_call.1']
    %12 = vsyncpa [#allocation3], 0
    %s13 = scalar_lea.sflag [#allocation3], 1
    %14 = vsyncpa %s13, 0
    loop: start=0, step=1, limit=4
    $region2: #{tpu_custom_call.1} parent=1 // loop_pre_header
      _
    $region3: #{tpu_custom_call.1} parent=1 // loop_header
      %s16 = sphi 0, %s20
      %p17 = scmp.ge.s32.totalorder %s16, 4
      %s26 = sphi 0, %s28
      %s29 = sphi 0, %s26
      %s30 = sphi 0, %s29
      %s46 = sphi 0, %s30
      %s50 = sphi 0, %s50
      %s52 = sphi 0, %s50
      %s53 = sphi 0, %s52
      %s67 = sphi 0, %s53
      %s71 = sphi 0, %s71
      %s73 = sphi 0, %s71
      %s74 = sphi 0, %s73
      %s88 = sphi 0, %s74
      %s92 = sphi 0, %s92
      %s94 = sphi 0, %s92
      %s95 = sphi 0, %s94
      %s109 = sphi 0, %s95
      %s113 = sphi 0, %s113
      %s115 = sphi 0, %s113
      %s116 = sphi 0, %s115
      %s130 = sphi 0, %s116
      %s134 = sphi 0, %s134
      %s136 = sphi 0, %s134
      %s137 = sphi 0, %s136
      %s151 = sphi 0, %s137
      %s155 = sphi 0, %s155
      %s157 = sphi 0, %s155
      %s158 = sphi 0, %s157
      %s172 = sphi 0, %s158
      %s178 = sphi 0, %s180
      %s181 = sphi 0, %s178
      %s182 = sphi 0, %s181
      %s198 = sphi 0, %s182
    $region4: #{tpu_custom_call.1} parent=1 // loop_header_branch
      %19 = sbr.rel (%p17) target = $region8
    $region5: #{tpu_custom_call.1} parent=1 // loop_body
      %s21 = ssub.s32 %s16, 1
      %s22 = ssub.s32 %s16, 2
      %s23 = sadd.s32 %s16, 1
      %s24 = ssub.s32 %s16, %s23
      %p25 = scmp.eq.s32.totalorder %s24, 0
      %s27 = sadd.s32 %s26, 1
      %s28 = scalar_select %p25, %s26, %s27
      %p31 = pneg %p25
      %p32 = scmp.eq.s32.totalorder %s16, 1
      %p33 = por %p31, %p32
      %p34 = scmp.ne.s32.totalorder %s26, %s29
      %p35 = scmp.eq.s32.totalorder %s16, 0
      %p36 = por %p34, %p35
      %p37 = scmp.ne.s32.totalorder %s26, %s29
      %p38 = scmp.eq.s32.totalorder %s21, 1
      %p39 = por %p37, %p38
      %p40 = scmp.ne.s32.totalorder %s29, %s30
      %p41 = scmp.eq.s32.totalorder %s21, 0
      %p42 = por %p40, %p41
      %p43 = scmp.ne.s32.totalorder %s29, %s30
      %p44 = scmp.eq.s32.totalorder %s22, 1
      %p45 = por %p43, %p44
      %p47 = scmp.ne.s32.totalorder %s30, %s46
      %p48 = scmp.eq.s32.totalorder %s22, 0
      %p49 = por %p47, %p48
      %s51 = sadd.s32 %s50, 1
      %p54 = scmp.eq.s32.totalorder %s16, 1
      %p55 = scmp.ne.s32.totalorder %s50, %s52
      %p56 = scmp.eq.s32.totalorder %s16, 0
      %p57 = por %p55, %p56
      %p58 = scmp.ne.s32.totalorder %s50, %s52
      %p59 = scmp.eq.s32.totalorder %s21, 1
      %p60 = por %p58, %p59
      %p61 = scmp.ne.s32.totalorder %s52, %s53
      %p62 = scmp.eq.s32.totalorder %s21, 0
      %p63 = por %p61, %p62
      %p64 = scmp.ne.s32.totalorder %s52, %s53
      %p65 = scmp.eq.s32.totalorder %s22, 1
      %p66 = por %p64, %p65
      %p68 = scmp.ne.s32.totalorder %s53, %s67
      %p69 = scmp.eq.s32.totalorder %s22, 0
      %p70 = por %p68, %p69
      %s72 = sadd.s32 %s71, 1
      %p75 = scmp.eq.s32.totalorder %s16, 1
      %p76 = scmp.ne.s32.totalorder %s71, %s73
      %p77 = scmp.eq.s32.totalorder %s16, 0
      %p78 = por %p76, %p77
      %p79 = scmp.ne.s32.totalorder %s71, %s73
      %p80 = scmp.eq.s32.totalorder %s21, 1
      %p81 = por %p79, %p80
      %p82 = scmp.ne.s32.totalorder %s73, %s74
      %p83 = scmp.eq.s32.totalorder %s21, 0
      %p84 = por %p82, %p83
      %p85 = scmp.ne.s32.totalorder %s73, %s74
      %p86 = scmp.eq.s32.totalorder %s22, 1
      %p87 = por %p85, %p86
      %p89 = scmp.ne.s32.totalorder %s74, %s88
      %p90 = scmp.eq.s32.totalorder %s22, 0
      %p91 = por %p89, %p90
      %s93 = sadd.s32 %s92, 1
      %p96 = scmp.eq.s32.totalorder %s16, 1
      %p97 = scmp.ne.s32.totalorder %s92, %s94
      %p98 = scmp.eq.s32.totalorder %s16, 0
      %p99 = por %p97, %p98
      %p100 = scmp.ne.s32.totalorder %s92, %s94
      %p101 = scmp.eq.s32.totalorder %s21, 1
      %p102 = por %p100, %p101
      %p103 = scmp.ne.s32.totalorder %s94, %s95
      %p104 = scmp.eq.s32.totalorder %s21, 0
      %p105 = por %p103, %p104
      %p106 = scmp.ne.s32.totalorder %s94, %s95
      %p107 = scmp.eq.s32.totalorder %s22, 1
      %p108 = por %p106, %p107
      %p110 = scmp.ne.s32.totalorder %s95, %s109
      %p111 = scmp.eq.s32.totalorder %s22, 0
      %p112 = por %p110, %p111
      %s114 = sadd.s32 %s113, 1
      %p117 = scmp.eq.s32.totalorder %s16, 1
      %p118 = scmp.ne.s32.totalorder %s113, %s115
      %p119 = scmp.eq.s32.totalorder %s16, 0
      %p120 = por %p118, %p119
      %p121 = scmp.ne.s32.totalorder %s113, %s115
      %p122 = scmp.eq.s32.totalorder %s21, 1
      %p123 = por %p121, %p122
      %p124 = scmp.ne.s32.totalorder %s115, %s116
      %p125 = scmp.eq.s32.totalorder %s21, 0
      %p126 = por %p124, %p125
      %p127 = scmp.ne.s32.totalorder %s115, %s116
      %p128 = scmp.eq.s32.totalorder %s22, 1
      %p129 = por %p127, %p128
      %p131 = scmp.ne.s32.totalorder %s116, %s130
      %p132 = scmp.eq.s32.totalorder %s22, 0
      %p133 = por %p131, %p132
      %s135 = sadd.s32 %s134, 1
      %p138 = scmp.eq.s32.totalorder %s16, 1
      %p139 = scmp.ne.s32.totalorder %s134, %s136
      %p140 = scmp.eq.s32.totalorder %s16, 0
      %p141 = por %p139, %p140
      %p142 = scmp.ne.s32.totalorder %s134, %s136
      %p143 = scmp.eq.s32.totalorder %s21, 1
      %p144 = por %p142, %p143
      %p145 = scmp.ne.s32.totalorder %s136, %s137
      %p146 = scmp.eq.s32.totalorder %s21, 0
      %p147 = por %p145, %p146
      %p148 = scmp.ne.s32.totalorder %s136, %s137
      %p149 = scmp.eq.s32.totalorder %s22, 1
      %p150 = por %p148, %p149
      %p152 = scmp.ne.s32.totalorder %s137, %s151
      %p153 = scmp.eq.s32.totalorder %s22, 0
      %p154 = por %p152, %p153
      %s156 = sadd.s32 %s155, 1
      %p159 = scmp.eq.s32.totalorder %s16, 1
      %p160 = scmp.ne.s32.totalorder %s155, %s157
      %p161 = scmp.eq.s32.totalorder %s16, 0
      %p162 = por %p160, %p161
      %p163 = scmp.ne.s32.totalorder %s155, %s157
      %p164 = scmp.eq.s32.totalorder %s21, 1
      %p165 = por %p163, %p164
      %p166 = scmp.ne.s32.totalorder %s157, %s158
      %p167 = scmp.eq.s32.totalorder %s21, 0
      %p168 = por %p166, %p167
      %p169 = scmp.ne.s32.totalorder %s157, %s158
      %p170 = scmp.eq.s32.totalorder %s22, 1
      %p171 = por %p169, %p170
      %p173 = scmp.ne.s32.totalorder %s158, %s172
      %p174 = scmp.eq.s32.totalorder %s22, 0
      %p175 = por %p173, %p174
      %s176 = ssub.s32 %s16, %s23
      %p177 = scmp.eq.s32.totalorder %s176, 0
      %s179 = sadd.s32 %s178, 1
      %s180 = scalar_select %p177, %s178, %s179
      %p183 = pneg %p177
      %p184 = scmp.eq.s32.totalorder %s16, 1
      %p185 = por %p183, %p184
      %p186 = scmp.ne.s32.totalorder %s178, %s181
      %p187 = scmp.eq.s32.totalorder %s16, 0
      %p188 = por %p186, %p187
      %p189 = scmp.ne.s32.totalorder %s178, %s181
      %p190 = scmp.eq.s32.totalorder %s21, 1
      %p191 = por %p189, %p190
      %p192 = scmp.ne.s32.totalorder %s181, %s182
      %p193 = scmp.eq.s32.totalorder %s21, 0
      %p194 = por %p192, %p193
      %p195 = scmp.ne.s32.totalorder %s181, %s182
      %p196 = scmp.eq.s32.totalorder %s22, 1
      %p197 = por %p195, %p196
      %p199 = scmp.ne.s32.totalorder %s182, %s198
      %p200 = scmp.eq.s32.totalorder %s22, 0
      %p201 = por %p199, %p200
      %p202 = scmp.le.s32.totalorder 1, %s16
      %p203 = scmp.lt.s32.totalorder %s16, 3
      %p204 = pnand %p202, %p203
      %p205 = pneg %p204
      // Predicated region
      $region9: #{tpu_custom_call.1} parent=5 // pred_check
        _
      $region10: #{tpu_custom_call.1} parent=5 // pred_check_branch
        %207 = sbr.rel (%p204) target = $region12
      $region11: #{tpu_custom_call.1} parent=5 // pred_region
        %s208 = ssub.s32 %s16, 1
        // Predicated region
        $region13: #{tpu_custom_call.1} parent=11 // pred_check
          %p209 = pneg %p63
        $region14: #{tpu_custom_call.1} parent=11 // pred_check_branch
          %211 = sbr.rel (%p209) target = $region16
        $region15: #{tpu_custom_call.1} parent=11 // pred_region
          _
        $region16: #{tpu_custom_call.1} parent=11 // pred_fallthru
          _
        // Predicated region
        $region17: #{tpu_custom_call.1} parent=11 // pred_check
          %p212 = pneg %p84
        $region18: #{tpu_custom_call.1} parent=11 // pred_check_branch
          %214 = sbr.rel (%p212) target = $region20
        $region19: #{tpu_custom_call.1} parent=11 // pred_region
          _
        $region20: #{tpu_custom_call.1} parent=11 // pred_fallthru
          _
        // Predicated region
        $region21: #{tpu_custom_call.1} parent=11 // pred_check
          %p215 = pneg %p105
        $region22: #{tpu_custom_call.1} parent=11 // pred_check_branch
          %217 = sbr.rel (%p215) target = $region24
        $region23: #{tpu_custom_call.1} parent=11 // pred_region
          _
        $region24: #{tpu_custom_call.1} parent=11 // pred_fallthru
          _
        // Predicated region
        $region25: #{tpu_custom_call.1} parent=11 // pred_check
          %p218 = pneg %p126
        $region26: #{tpu_custom_call.1} parent=11 // pred_check_branch
          %220 = sbr.rel (%p218) target = $region28
        $region27: #{tpu_custom_call.1} parent=11 // pred_region
          _
        $region28: #{tpu_custom_call.1} parent=11 // pred_fallthru
          _
        // Predicated region
        $region29: #{tpu_custom_call.1} parent=11 // pred_check
          %p221 = pneg %p147
        $region30: #{tpu_custom_call.1} parent=11 // pred_check_branch
          %223 = sbr.rel (%p221) target = $region32
        $region31: #{tpu_custom_call.1} parent=11 // pred_region
          _
        $region32: #{tpu_custom_call.1} parent=11 // pred_fallthru
          _
        // Predicated region
        $region33: #{tpu_custom_call.1} parent=11 // pred_check
          %p224 = pneg %p168
        $region34: #{tpu_custom_call.1} parent=11 // pred_check_branch
          %226 = sbr.rel (%p224) target = $region36
        $region35: #{tpu_custom_call.1} parent=11 // pred_region
          _
        $region36: #{tpu_custom_call.1} parent=11 // pred_fallthru
          _
      $region12: #{tpu_custom_call.1} parent=5 // pred_fallthru
        _
      %p227 = scmp.lt.s32.totalorder %s16, 2
      // Predicated region
      $region37: #{tpu_custom_call.1} parent=5 // pred_check
        %p228 = pneg %p227
      $region38: #{tpu_custom_call.1} parent=5 // pred_check_branch
        %230 = sbr.rel (%p228) target = $region40
      $region39: #{tpu_custom_call.1} parent=5 // pred_region
        // Predicated region
        $region41: #{tpu_custom_call.1} parent=39 // pred_check
          %p231 = pneg %p36
        $region42: #{tpu_custom_call.1} parent=39 // pred_check_branch
          %233 = sbr.rel (%p231) target = $region44
        $region43: #{tpu_custom_call.1} parent=39 // pred_region
          %s234 = smul.u32 4, %s16
          %p235 = scmp.lt.s32.totalorder %s234, 7
          %s236 = scalar_select %p235, %s234, 7
          %s237 = smul.addr %s236, 8
          %s238 = scalar_lea.vmem %s0, %s237
          %s239 = smul.u32 4, %s16
        $region44: #{tpu_custom_call.1} parent=39 // pred_fallthru
          _
      $region40: #{tpu_custom_call.1} parent=5 // pred_fallthru
        _
      %p240 = scmp.le.s32.totalorder 1, %s16
      %p241 = scmp.lt.s32.totalorder %s16, 3
      %p242 = pnand %p240, %p241
      %p243 = pneg %p242
      // Predicated region
      $region45: #{tpu_custom_call.1} parent=5 // pred_check
        _
      $region46: #{tpu_custom_call.1} parent=5 // pred_check_branch
        %245 = sbr.rel (%p242) target = $region48
      $region47: #{tpu_custom_call.1} parent=5 // pred_region
        %s246 = ssub.s32 %s16, 1
        %s247 = smul.u32 4, %s21
        %p248 = scmp.lt.s32.totalorder %s247, 7
        %s249 = scalar_select %p248, %s247, 7
        %s250 = smul.addr %s249, 8
        %s251 = scalar_lea.vmem %s0, %s250
        %p252 = pneg %p42
        %p253 = pneg %p39
        %p254 = pneg %p63
        %p255 = pneg %p60
        %p256 = pneg %p84
        %p257 = pneg %p81
        %p258 = pneg %p105
        %p259 = pneg %p102
        %p260 = pneg %p126
        %p261 = pneg %p123
        %p262 = pneg %p147
        %p263 = pneg %p144
        %p264 = pneg %p168
        %p265 = pneg %p165
        %p266 = pneg %p194
        %p267 = pneg %p191
        %s268 = sand.u32 %s181, 1
        %s269 = scalar_lea.sflag [#allocation3], %s268
        %s270 = sand.u32 %s181, 1
        %s271 = smul.addr %s270, 32
        %s272 = scalar_lea.vmem [#allocation2], %s271
        %s273 = smul.u32 4, %s21
        %p274 = scmp.lt.s32.totalorder %s273, 7
        %s275 = scalar_select %p274, %s273, 7
        %s276 = smul.addr %s275, 8
        %s277 = scalar_lea.vmem %s0, %s276
        %s278 = smul.u32 4, %s21
        %s279 = smul.u32 4, %s21
        %v280 = vld [vmem:[%s277] sm:$0xff]
        %v281 = vld [vmem:[%s277 + $0x8] sm:$0xff]
        %v282 = vld [vmem:[%s277 + $0x10] sm:$0xff]
        %v283 = vld [vmem:[%s277 + $0x18] sm:$0xff]
        %v284 = vld [vmem:[%s1] sm:$0x1]
        %v286 = vlaneseq
        %v287 = vshrl.u32 %v286, 7
        %v288 = vsub.s32 0, %v287
        %v289 = vrot.slane %v284, %v288
        %v291 = vmul.f32 %v280, %v289
        %v292 = vmul.f32 %v281, %v289
        %v293 = vmul.f32 %v282, %v289
        %v294 = vmul.f32 %v283, %v289
        %v295 = vld [vmem:[%s2] sm:$0x1]
        %v297 = vlaneseq
        %v298 = vshrl.u32 %v297, 7
        %v299 = vsub.s32 0, %v298
        %v300 = vrot.slane %v295, %v299
        %v302 = vadd.f32 %v291, %v300
        %v303 = vadd.f32 %v292, %v300
        %v304 = vadd.f32 %v293, %v300
        %v305 = vadd.f32 %v294, %v300
        %vm306 = vcmask 261120
        %v307 = vsel %vm306, %v302, 0.0
        %308 = vadd.xlane.f32.xlu0 %v307
        %v309 = vpop.xlane.xlu0 %308
        %v310 = vsel %vm306, %v303, 0.0
        %311 = vadd.xlane.f32.xlu0 %v310
        %v312 = vpop.xlane.xlu0 %311
        %v313 = vsel %vm306, %v304, 0.0
        %314 = vadd.xlane.f32.xlu0 %v313
        %v315 = vpop.xlane.xlu0 %314
        %v316 = vsel %vm306, %v305, 0.0
        %317 = vadd.xlane.f32.xlu0 %v316
        %v318 = vpop.xlane.xlu0 %317
        %v319 = vmul.f32 %v309, 0.03125
        %v320 = vmul.f32 %v312, 0.03125
        %v321 = vmul.f32 %v315, 0.03125
        %v322 = vmul.f32 %v318, 0.03125
        %v323 = vmul.f32 %v302, %v302
        %v324 = vmul.f32 %v303, %v303
        %v325 = vmul.f32 %v304, %v304
        %v326 = vmul.f32 %v305, %v305
        %v327 = vsel %vm306, %v323, 0.0
        %328 = vadd.xlane.f32.xlu0 %v327
        %v329 = vpop.xlane.xlu0 %328
        %v330 = vsel %vm306, %v324, 0.0
        %331 = vadd.xlane.f32.xlu0 %v330
        %v332 = vpop.xlane.xlu0 %331
        %v333 = vsel %vm306, %v325, 0.0
        %334 = vadd.xlane.f32.xlu0 %v333
        %v335 = vpop.xlane.xlu0 %334
        %v336 = vsel %vm306, %v326, 0.0
        %337 = vadd.xlane.f32.xlu0 %v336
        %v338 = vpop.xlane.xlu0 %337
        %v339 = vmul.f32 %v329, 0.03125
        %v340 = vmul.f32 %v332, 0.03125
        %v341 = vmul.f32 %v335, 0.03125
        %v342 = vmul.f32 %v338, 0.03125
        %v343 = vmul.f32 %v319, %v319
        %v344 = vmul.f32 %v320, %v320
        %v345 = vmul.f32 %v321, %v321
        %v346 = vmul.f32 %v322, %v322
        %v347 = vsub.f32 %v339, %v343
        %v348 = vsub.f32 %v340, %v344
        %v349 = vsub.f32 %v341, %v345
        %v350 = vsub.f32 %v342, %v346
        %v351 = vmax.f32 %v347, 0.0
        %v352 = vmax.f32 %v348, 0.0
        %v353 = vmax.f32 %v349, 0.0
        %v354 = vmax.f32 %v350, 0.0
        %v355 = vsub.f32 %v302, %v319
        %v356 = vsub.f32 %v303, %v320
        %v357 = vsub.f32 %v304, %v321
        %v358 = vsub.f32 %v305, %v322
        %v359 = vadd.f32 %v351, 1e-05
        %v360 = vadd.f32 %v352, 1e-05
        %v361 = vadd.f32 %v353, 1e-05
        %v362 = vadd.f32 %v354, 1e-05
        %v363 = vrsqrt.pop %v359
        %v364 = vrsqrt.pop %v360
        %v365 = vrsqrt.pop %v361
        %v366 = vrsqrt.pop %v362
        %v367 = vmul.f32 %v355, %v363
        %v368 = vmul.f32 %v356, %v364
        %v369 = vmul.f32 %v357, %v365
        %v370 = vmul.f32 %v358, %v366
        %v371 = vld [vmem:[%s3] sm:$0xff]
        %v372 = vld [vmem:[%s3 + $0x8] sm:$0xff]
        %v373 = vld [vmem:[%s3 + $0x10] sm:$0xff]
        %v374 = vld [vmem:[%s3 + $0x18] sm:$0xff]
        %v375 = vld [vmem:[%s4] sm:$0x1]
        %v377 = vlaneseq
        %v378 = vshrl.u32 %v377, 7
        %v379 = vsub.s32 0, %v378
        %v380 = vrot.slane %v375, %v379
        %v383 = vsel %vm306, %v367, 0
        %v386 = vsel %vm306, %v368, 0
        %v389 = vsel %vm306, %v369, 0
        %v392 = vsel %vm306, %v370, 0
        %394 = vmatprep.subr.mxu0 0.0
        %395 = vmatpush1.msra.mxu0 0.0
        %396 = vmatprep.subr.mxu0 0.0
        %397 = vmatpush1.msra.mxu0 0.0
        %398 = vmatprep.subr.mxu0 0.0
        %399 = vmatpush1.msra.mxu0 0.0
        %400 = vmatprep.subr.mxu0 0.0
        %401 = vmatpush1.msra.mxu0 0.0
        %402 = vmatprep.subr.mxu0 0.0
        %403 = vmatpush1.msra.mxu0 0.0
        %404 = vmatprep.subr.mxu0 0.0
        %405 = vmatpush1.msra.mxu0 0.0
        %406 = vmatprep.subr.mxu0 0.0
        %407 = vmatpush1.msra.mxu0 0.0
        %408 = vmatprep.subr.mxu0 0.0
        %409 = vmatpush1.msra.mxu0 0.0
        %410 = vmatprep.subr.mxu0 0.0
        %411 = vmatpush1.msra.mxu0 0.0
        %412 = vmatprep.subr.mxu0 0.0
        %413 = vmatpush1.msra.mxu0 0.0
        %414 = vmatprep.subr.mxu0 0.0
        %415 = vmatpush1.msra.mxu0 0.0
        %416 = vmatprep.subr.mxu0 0.0
        %417 = vmatpush1.msra.mxu0 0.0
        %418 = vmatprep.subr.mxu0 0.0
        %419 = vmatpush1.msra.mxu0 %v374
        %420 = vmatprep.subr.mxu0 0.0
        %421 = vmatpush1.msra.mxu0 %v373
        %422 = vmatprep.subr.mxu0 0.0
        %423 = vmatpush1.msra.mxu0 %v372
        %424 = vmatprep.subr.mxu0 0.0
        %425 = vmatpush1.msra.mxu0 %v371
        %426 = vmatprep.subr.mxu0 0.0
        %427 = vmatpush2.msra.mxu0 0.0
        %428 = vmatprep.subr.mxu0 0.0
        %429 = vmatpush2.msra.mxu0 0.0
        %430 = vmatprep.subr.mxu0 0.0
        %431 = vmatpush2.msra.mxu0 0.0
        %432 = vmatprep.subr.mxu0 0.0
        %433 = vmatpush2.msra.mxu0 0.0
        %434 = vmatprep.subr.mxu0 0.0
        %435 = vmatpush2.msra.mxu0 0.0
        %436 = vmatprep.subr.mxu0 0.0
        %437 = vmatpush2.msra.mxu0 0.0
        %438 = vmatprep.subr.mxu0 0.0
        %439 = vmatpush2.msra.mxu0 0.0
        %440 = vmatprep.subr.mxu0 0.0
        %441 = vmatpush2.msra.mxu0 0.0
        %442 = vmatprep.subr.mxu0 0.0
        %443 = vmatpush2.msra.mxu0 0.0
        %444 = vmatprep.subr.mxu0 0.0
        %445 = vmatpush2.msra.mxu0 0.0
        %446 = vmatprep.subr.mxu0 0.0
        %447 = vmatpush2.msra.mxu0 0.0
        %448 = vmatprep.subr.mxu0 0.0
        %449 = vmatpush2.msra.mxu0 0.0
        %450 = vmatprep.subr.mxu0 0.0
        %451 = vmatpush2.msra.mxu0 0.0
        %452 = vmatprep.subr.mxu0 0.0
        %453 = vmatpush2.msra.mxu0 0.0
        %454 = vmatprep.subr.mxu0 0.0
        %455 = vmatpush2.msra.mxu0 0.0
        %456 = vmatprep.subr.mxu0 0.0
        %457 = vmatpush2.msra.mxu0 0.0
        %458 = vmatprep.mubr.f32.mxu0 0.0
        %459 = vmatmul.mubr.f32.gmra.mxu0 %v383
        %v460 = vpop.f32.mrf.mxu0
        %v461 = vadd.f32 %v380, %v460
        %v462 = vpop.f32.mrf.mxu0
        %463 = vmatprep.mubr.f32.mxu0 0.0
        %464 = vmatmul.mubr.f32.gmra.mxu0 %v386
        %v465 = vpop.f32.mrf.mxu0
        %v466 = vadd.f32 %v380, %v465
        %v467 = vpop.f32.mrf.mxu0
        %468 = vmatprep.mubr.f32.mxu0 0.0
        %469 = vmatmul.mubr.f32.gmra.mxu0 %v389
        %v470 = vpop.f32.mrf.mxu0
        %v471 = vadd.f32 %v380, %v470
        %v472 = vpop.f32.mrf.mxu0
        %473 = vmatprep.mubr.f32.mxu0 0.0
        %474 = vmatmul.mubr.f32.gmra.mxu0 %v392
        %v475 = vpop.f32.mrf.mxu0
        %v476 = vadd.f32 %v380, %v475
        %v477 = vpop.f32.mrf.mxu0
        %478 = vdwg.mxu0
        %v479 = vmul.f32 %v461, 0.5
        %v480 = vmul.f32 %v466, 0.5
        %v481 = vmul.f32 %v471, 0.5
        %v482 = vmul.f32 %v476, 0.5
        %v483 = vmul.f32 %v461, 0.70710677
        %v484 = vmul.f32 %v466, 0.70710677
        %v485 = vmul.f32 %v471, 0.70710677
        %v486 = vmul.f32 %v476, 0.70710677
        %v487 = verf.f32.pop %v483
        %v488 = verf.f32.pop %v484
        %v489 = verf.f32.pop %v485
        %v490 = verf.f32.pop %v486
        %v491 = vadd.f32 %v487, 1.0
        %v492 = vadd.f32 %v488, 1.0
        %v493 = vadd.f32 %v489, 1.0
        %v494 = vadd.f32 %v490, 1.0
        %v495 = vmul.f32 %v479, %v491
        %v496 = vmul.f32 %v480, %v492
        %v497 = vmul.f32 %v481, %v493
        %v498 = vmul.f32 %v482, %v494
        %vm499 = vcmask 523264
        %v500 = vsel %vm499, %v495, 0.0
        %501 = vadd.xlane.f32.xlu0 %v500
        %v502 = vpop.xlane.xlu0 %501
        %v503 = vsel %vm499, %v496, 0.0
        %504 = vadd.xlane.f32.xlu0 %v503
        %v505 = vpop.xlane.xlu0 %504
        %v506 = vsel %vm499, %v497, 0.0
        %507 = vadd.xlane.f32.xlu0 %v506
        %v508 = vpop.xlane.xlu0 %507
        %v509 = vsel %vm499, %v498, 0.0
        %510 = vadd.xlane.f32.xlu0 %v509
        %v511 = vpop.xlane.xlu0 %510
        %v512 = vmul.f32 %v502, 0.015625
        %v513 = vmul.f32 %v505, 0.015625
        %v514 = vmul.f32 %v508, 0.015625
        %v515 = vmul.f32 %v511, 0.015625
        %v516 = vmul.f32 %v495, %v495
        %v517 = vmul.f32 %v496, %v496
        %v518 = vmul.f32 %v497, %v497
        %v519 = vmul.f32 %v498, %v498
        %v520 = vsel %vm499, %v516, 0.0
        %521 = vadd.xlane.f32.xlu0 %v520
        %v522 = vpop.xlane.xlu0 %521
        %v523 = vsel %vm499, %v517, 0.0
        %524 = vadd.xlane.f32.xlu0 %v523
        %v525 = vpop.xlane.xlu0 %524
        %v526 = vsel %vm499, %v518, 0.0
        %527 = vadd.xlane.f32.xlu0 %v526
        %v528 = vpop.xlane.xlu0 %527
        %v529 = vsel %vm499, %v519, 0.0
        %530 = vadd.xlane.f32.xlu0 %v529
        %v531 = vpop.xlane.xlu0 %530
        %v532 = vmul.f32 %v522, 0.015625
        %v533 = vmul.f32 %v525, 0.015625
        %v534 = vmul.f32 %v528, 0.015625
        %v535 = vmul.f32 %v531, 0.015625
        %v536 = vmul.f32 %v512, %v512
        %v537 = vmul.f32 %v513, %v513
        %v538 = vmul.f32 %v514, %v514
        %v539 = vmul.f32 %v515, %v515
        %v540 = vsub.f32 %v532, %v536
        %v541 = vsub.f32 %v533, %v537
        %v542 = vsub.f32 %v534, %v538
        %v543 = vsub.f32 %v535, %v539
        %v544 = vmax.f32 %v540, 0.0
        %v545 = vmax.f32 %v541, 0.0
        %v546 = vmax.f32 %v542, 0.0
        %v547 = vmax.f32 %v543, 0.0
        %v548 = vsub.f32 %v495, %v512
        %v549 = vsub.f32 %v496, %v513
        %v550 = vsub.f32 %v497, %v514
        %v551 = vsub.f32 %v498, %v515
        %v552 = vadd.f32 %v544, 1e-05
        %v553 = vadd.f32 %v545, 1e-05
        %v554 = vadd.f32 %v546, 1e-05
        %v555 = vadd.f32 %v547, 1e-05
        %v556 = vrsqrt.pop %v552
        %v557 = vrsqrt.pop %v553
        %v558 = vrsqrt.pop %v554
        %v559 = vrsqrt.pop %v555
        %v560 = vmul.f32 %v548, %v556
        %v561 = vmul.f32 %v549, %v557
        %v562 = vmul.f32 %v550, %v558
        %v563 = vmul.f32 %v551, %v559
        %v564 = vld [vmem:[%s5] sm:$0xff]
        %v565 = vld [vmem:[%s5 + $0x8] sm:$0xff]
        %v566 = vld [vmem:[%s5 + $0x10] sm:$0xff]
        %v567 = vld [vmem:[%s5 + $0x18] sm:$0xff]
        %v568 = vld [vmem:[%s5 + $0x20] sm:$0xff]
        %v569 = vld [vmem:[%s5 + $0x28] sm:$0xff]
        %v570 = vld [vmem:[%s5 + $0x30] sm:$0xff]
        %v571 = vld [vmem:[%s5 + $0x38] sm:$0xff]
        %v572 = vld [vmem:[%s6] sm:$0x1]
        %v574 = vlaneseq
        %v575 = vshrl.u32 %v574, 7
        %v576 = vsub.s32 0, %v575
        %v577 = vrot.slane %v572, %v576
        %v580 = vsel %vm499, %v560, 0
        %v583 = vsel %vm499, %v561, 0
        %v586 = vsel %vm499, %v562, 0
        %v589 = vsel %vm499, %v563, 0
        %591 = vmatprep.subr.mxu0 0.0
        %592 = vmatpush1.msra.mxu0 0.0
        %593 = vmatprep.subr.mxu0 0.0
        %594 = vmatpush1.msra.mxu0 0.0
        %595 = vmatprep.subr.mxu0 0.0
        %596 = vmatpush1.msra.mxu0 0.0
        %597 = vmatprep.subr.mxu0 0.0
        %598 = vmatpush1.msra.mxu0 0.0
        %599 = vmatprep.subr.mxu0 0.0
        %600 = vmatpush1.msra.mxu0 0.0
        %601 = vmatprep.subr.mxu0 0.0
        %602 = vmatpush1.msra.mxu0 0.0
        %603 = vmatprep.subr.mxu0 0.0
        %604 = vmatpush1.msra.mxu0 0.0
        %605 = vmatprep.subr.mxu0 0.0
        %606 = vmatpush1.msra.mxu0 0.0
        %607 = vmatprep.subr.mxu0 0.0
        %608 = vmatpush1.msra.mxu0 %v571
        %609 = vmatprep.subr.mxu0 0.0
        %610 = vmatpush1.msra.mxu0 %v570
        %611 = vmatprep.subr.mxu0 0.0
        %612 = vmatpush1.msra.mxu0 %v569
        %613 = vmatprep.subr.mxu0 0.0
        %614 = vmatpush1.msra.mxu0 %v568
        %615 = vmatprep.subr.mxu0 0.0
        %616 = vmatpush1.msra.mxu0 %v567
        %617 = vmatprep.subr.mxu0 0.0
        %618 = vmatpush1.msra.mxu0 %v566
        %619 = vmatprep.subr.mxu0 0.0
        %620 = vmatpush1.msra.mxu0 %v565
        %621 = vmatprep.subr.mxu0 0.0
        %622 = vmatpush1.msra.mxu0 %v564
        %623 = vmatprep.subr.mxu0 0.0
        %624 = vmatpush2.msra.mxu0 0.0
        %625 = vmatprep.subr.mxu0 0.0
        %626 = vmatpush2.msra.mxu0 0.0
        %627 = vmatprep.subr.mxu0 0.0
        %628 = vmatpush2.msra.mxu0 0.0
        %629 = vmatprep.subr.mxu0 0.0
        %630 = vmatpush2.msra.mxu0 0.0
        %631 = vmatprep.subr.mxu0 0.0
        %632 = vmatpush2.msra.mxu0 0.0
        %633 = vmatprep.subr.mxu0 0.0
        %634 = vmatpush2.msra.mxu0 0.0
        %635 = vmatprep.subr.mxu0 0.0
        %636 = vmatpush2.msra.mxu0 0.0
        %637 = vmatprep.subr.mxu0 0.0
        %638 = vmatpush2.msra.mxu0 0.0
        %639 = vmatprep.subr.mxu0 0.0
        %640 = vmatpush2.msra.mxu0 0.0
        %641 = vmatprep.subr.mxu0 0.0
        %642 = vmatpush2.msra.mxu0 0.0
        %643 = vmatprep.subr.mxu0 0.0
        %644 = vmatpush2.msra.mxu0 0.0
        %645 = vmatprep.subr.mxu0 0.0
        %646 = vmatpush2.msra.mxu0 0.0
        %647 = vmatprep.subr.mxu0 0.0
        %648 = vmatpush2.msra.mxu0 0.0
        %649 = vmatprep.subr.mxu0 0.0
        %650 = vmatpush2.msra.mxu0 0.0
        %651 = vmatprep.subr.mxu0 0.0
        %652 = vmatpush2.msra.mxu0 0.0
        %653 = vmatprep.subr.mxu0 0.0
        %654 = vmatpush2.msra.mxu0 0.0
        %655 = vmatprep.mubr.f32.mxu0 0.0
        %656 = vmatmul.mubr.f32.gmra.mxu0 %v580
        %v657 = vpop.f32.mrf.mxu0
        %v658 = vadd.f32 %v577, %v657
        %v659 = vpop.f32.mrf.mxu0
        %660 = vmatprep.mubr.f32.mxu0 0.0
        %661 = vmatmul.mubr.f32.gmra.mxu0 %v583
        %v662 = vpop.f32.mrf.mxu0
        %v663 = vadd.f32 %v577, %v662
        %v664 = vpop.f32.mrf.mxu0
        %665 = vmatprep.mubr.f32.mxu0 0.0
        %666 = vmatmul.mubr.f32.gmra.mxu0 %v586
        %v667 = vpop.f32.mrf.mxu0
        %v668 = vadd.f32 %v577, %v667
        %v669 = vpop.f32.mrf.mxu0
        %670 = vmatprep.mubr.f32.mxu0 0.0
        %671 = vmatmul.mubr.f32.gmra.mxu0 %v589
        %v672 = vpop.f32.mrf.mxu0
        %v673 = vadd.f32 %v577, %v672
        %v674 = vpop.f32.mrf.mxu0
        %675 = vdwg.mxu0
        %v676 = vmul.f32 %v658, 0.5
        %v677 = vmul.f32 %v663, 0.5
        %v678 = vmul.f32 %v668, 0.5
        %v679 = vmul.f32 %v673, 0.5
        %v680 = vmul.f32 %v658, 0.70710677
        %v681 = vmul.f32 %v663, 0.70710677
        %v682 = vmul.f32 %v668, 0.70710677
        %v683 = vmul.f32 %v673, 0.70710677
        %v684 = verf.f32.pop %v680
        %v685 = verf.f32.pop %v681
        %v686 = verf.f32.pop %v682
        %v687 = verf.f32.pop %v683
        %v688 = vadd.f32 %v684, 1.0
        %v689 = vadd.f32 %v685, 1.0
        %v690 = vadd.f32 %v686, 1.0
        %v691 = vadd.f32 %v687, 1.0
        %v692 = vmul.f32 %v676, %v688
        %v693 = vmul.f32 %v677, %v689
        %v694 = vmul.f32 %v678, %v690
        %v695 = vmul.f32 %v679, %v691
        %696 = vst [vmem:[%s272] sm:$0xff] %v692
        %697 = vst [vmem:[%s272 + $0x8] sm:$0xff] %v693
        %698 = vst [vmem:[%s272 + $0x10] sm:$0xff] %v694
        %699 = vst [vmem:[%s272 + $0x18] sm:$0xff] %v695
        %s700 = sand.u32 %s181, 1
        %s701 = scalar_lea.sflag [#allocation3], %s700
        %s702 = sand.u32 %s181, 1
        %s703 = smul.addr %s702, 32
        %s704 = scalar_lea.vmem [#allocation2], %s703
        // Predicated region
        $region49: #{tpu_custom_call.1} parent=47 // pred_check
          %p705 = pneg %p191
        $region50: #{tpu_custom_call.1} parent=47 // pred_check_branch
          %707 = sbr.rel (%p705) target = $region52
        $region51: #{tpu_custom_call.1} parent=47 // pred_region
          %s708 = smul.u32 4, %s21
          %s710 = ssub.s32 512, 512
          %711 = vsyncadd %s701, %s710
          %s712 = smul.addr %s708, 128
          %s713 = scalar_lea.hbm %s7, %s712
          %s714 = sshll.u32 %s704, 4
          %s715 = int_to_ptr.vmem [resolvable:$true] %s714
          %720 = dma.vmem_to_hbm [thread:$0]  %s715, 512, %s713, %s701, 128, 128, 8
        $region52: #{tpu_custom_call.1} parent=47 // pred_fallthru
          _
      $region48: #{tpu_custom_call.1} parent=5 // pred_fallthru
        _
      %p721 = scmp.le.s32.totalorder 2, %s16
      // Predicated region
      $region53: #{tpu_custom_call.1} parent=5 // pred_check
        %p722 = pneg %p721
      $region54: #{tpu_custom_call.1} parent=5 // pred_check_branch
        %724 = sbr.rel (%p722) target = $region56
      $region55: #{tpu_custom_call.1} parent=5 // pred_region
        %s725 = ssub.s32 %s16, 2
        // Predicated region
        $region57: #{tpu_custom_call.1} parent=55 // pred_check
          %p726 = pneg %p197
        $region58: #{tpu_custom_call.1} parent=55 // pred_check_branch
          %728 = sbr.rel (%p726) target = $region60
        $region59: #{tpu_custom_call.1} parent=55 // pred_region
          %s729 = sand.u32 %s182, 1
          %s730 = scalar_lea.sflag [#allocation3], %s729
          %s731 = sand.u32 %s182, 1
          %s732 = smul.addr %s731, 32
          %s733 = scalar_lea.vmem [#allocation2], %s732
          %734 = dma.done %s730, 512
        $region60: #{tpu_custom_call.1} parent=55 // pred_fallthru
          _
      $region56: #{tpu_custom_call.1} parent=5 // pred_fallthru
        _
    $region6: #{tpu_custom_call.1} parent=1 // loop_footer
      %s20 = sadd.s32 1, %s16
    $region7: #{tpu_custom_call.1} parent=1 // loop_footer_branch
      %15 = sbr.rel target = $region3
    $region8: #{tpu_custom_call.1} parent=1 // loop_exit
      _
    %735 = vsyncpa [#allocation3], 1
    %s736 = scalar_lea.sflag [#allocation3], 1
    %737 = vsyncpa %s736, 1

</llo_original>
